<compile_context>
chip_gen: v7x
topology: tpu7x:2x2x1
jax: 0.10.0
libtpu: 0.0.40
codegen_flags: <defaults>
</compile_context>

<pallas_src>
import functools

import jax
import jax.numpy as jnp
from jax.experimental import pallas as pl
from jax.experimental.pallas import tpu as pltpu

_LANE = 128
_SUBLANE = 8
_NEG_BIG = -1e30                     # masks padded logit columns before softmax
_BUFFERED = getattr(pl, "Buffered", None)   # feature-detect once (no runtime rerun)
_SINGLE_BUFFER_THRESHOLD = 4 << 20          # only request Buffered(1) when params are big


def _round_up(x, m):
    return (x + m - 1) // m * m


def _mlp_kernel(num_linear, mxu_dtype, *refs):
    """refs = (x_ref, w0, b0, ..., w{L-1}, b{L-1}, out_ref).

    For the current batch tile (weights pre-transposed to (in, out)):
        h = relu(x @ W0 + b0); ...; logits = h @ W{L-1} + b{L-1}
        out = softmax(logits, axis=-1)        (== PyTorch Softmax(dim=1))
    Padded logit columns carry a -1e30 bias so exp() underflows to exactly 0.
    """
    x_ref = refs[0]
    out_ref = refs[-1]
    param_refs = refs[1:-1]

    h = x_ref[...]                                  # (tile_b, in_pad) f32
    for i in range(num_linear):
        w = param_refs[2 * i][...]                  # (in_pad_i, out_pad_i), pre-transposed
        b = param_refs[2 * i + 1][...][0:1, :]      # (8, out_pad_i) f32 -> row 0
        acc = jnp.dot(h.astype(mxu_dtype), w, preferred_element_type=jnp.float32)
        h = acc + b                                 # f32 epilogue
        if i < num_linear - 1:                      # activation on all but last Linear
            h = jnp.maximum(h, 0.0)                 # nn.ReLU()

    # Numerically stable softmax over the feature axis; exact divide so rows
    # sum to 1 to f32 precision.
    m = jnp.max(h, axis=-1, keepdims=True)
    e = jnp.exp(h - m)
    s = jnp.sum(e, axis=-1, keepdims=True)
    out_ref[...] = (e / s).astype(out_ref.dtype)


def prepare_params(params, *, mxu_dtype=jnp.bfloat16):
    """One-time pad + transpose. params: list of (W, b) with W (out, in), b (out,).

    Weights -> (in, out) layout, zero-padded to lane multiples, cast to mxu_dtype.
    Biases stay f32, padded to (8, out_pad); the last layer's padded logit
    columns are set to -1e30.
    """
    num_linear = len(params)
    in_size = int(params[0][0].shape[1])
    out_size = int(params[-1][0].shape[0])
    in_pad = _round_up(in_size, _LANE)

    flat = []
    prev_pad = in_pad
    for li, (w, b) in enumerate(params):
        out_f, in_f = w.shape
        out_pad_f = _round_up(out_f, _LANE)
        wt = jnp.zeros((prev_pad, out_pad_f), jnp.float32).at[:in_f, :out_f].set(w.T)
        fill = _NEG_BIG if li == num_linear - 1 else 0.0
        bp = jnp.full((_SUBLANE, out_pad_f), fill, jnp.float32).at[0, :out_f].set(b)
        flat.append(wt.astype(mxu_dtype))
        flat.append(bp)
        prev_pad = out_pad_f

    meta = dict(num_linear=num_linear, in_size=in_size, out_size=out_size,
                in_pad=in_pad, out_pad=prev_pad, mxu_dtype=mxu_dtype)
    return tuple(flat), meta


def _forward(x, flat_params, meta):
    B, in_size = x.shape
    assert in_size == meta["in_size"], "input feature size mismatch"
    num_linear = meta["num_linear"]
    in_pad, out_pad = meta["in_pad"], meta["out_pad"]
    mxu_dtype = meta["mxu_dtype"]

    # Batch tiling: aim for >=2 grid steps so the "parallel" axis shards across
    # both TensorCores on v7x; cap tiles at 256 rows (VMEM + 2-TC split).
    b8 = _round_up(max(B, 1), _SUBLANE)
    tile_b = max(_SUBLANE, min(256, _round_up(pl.cdiv(b8, 2), _SUBLANE)))
    tile_b = min(tile_b, b8)
    b_pad = _round_up(b8, tile_b)
    grid = (b_pad // tile_b,)

    x_pad = jnp.zeros((b_pad, in_pad), jnp.float32).at[:B, :in_size].set(x)

    # VMEM budget derived from the actual buffers (cap leaves headroom on v7x's 64 MiB).
    param_bytes = sum(int(a.size) * a.dtype.itemsize for a in flat_params)
    widths = [in_pad] + [int(flat_params[2 * i].shape[1]) for i in range(num_linear)]
    act_bytes = 2 * tile_b * max(widths) * 4
    io_bytes = 2 * tile_b * (in_pad + out_pad) * 4
    need = 2 * param_bytes + io_bytes + act_bytes + (4 << 20)
    vmem_limit = int(min(48 << 20, max(need, 16 << 20)))

    # Constant-index params don't need double buffering; only request
    # Buffered(1) when their footprint is big enough to matter.
    single_buffer = _BUFFERED is not None and param_bytes > _SINGLE_BUFFER_THRESHOLD

    def param_spec(shape):
        if single_buffer:
            return pl.BlockSpec(shape, lambda i: (0, 0), pipeline_mode=_BUFFERED(1))
        return pl.BlockSpec(shape, lambda i: (0, 0))

    # TODO(synk): for layer_size where 2*param_bytes exceeds the VMEM cap, add a
    # K-reduction grid axis ("arbitrary") + f32 accumulator so weights stream
    # HBM->VMEM in tiles instead of being fully resident.
    in_specs = [pl.BlockSpec((tile_b, in_pad), lambda i: (i, 0))]
    in_specs += [param_spec(a.shape) for a in flat_params]
    out_spec = pl.BlockSpec((tile_b, out_pad), lambda i: (i, 0))

    kernel = functools.partial(_mlp_kernel, num_linear, mxu_dtype)
    out_full = pl.pallas_call(
        kernel,
        out_shape=jax.ShapeDtypeStruct((b_pad, out_pad), jnp.float32),
        grid_spec=pltpu.PrefetchScalarGridSpec(
            num_scalar_prefetch=0,
            grid=grid,
            in_specs=in_specs,
            out_specs=out_spec,
        ),
        compiler_params=pltpu.CompilerParams(
            dimension_semantics=("parallel",),
            vmem_limit_bytes=vmem_limit,
        ),
    )(x_pad, *flat_params)

    return out_full[:B, :meta["out_size"]]


def make_mlp_forward(params, *, mxu_dtype=jnp.bfloat16):
    """Prepare params once and return a jitted forward(x) -> softmax probs."""
    flat_params, meta = prepare_params(params, mxu_dtype=mxu_dtype)
    jitted = jax.jit(functools.partial(_forward, meta=meta))

    def forward(x):
        return jitted(x, flat_params)

    return forward


def init_mlp_params(key, input_size, num_layer, layer_size, output_size):
    """Deterministic init matching the nn.Linear shapes built by MLP.__init__."""
    sizes = []
    for i in range(num_layer):
        in_f = input_size if i == 0 else layer_size
        sizes.append((layer_size, in_f))
    sizes.append((output_size, layer_size))

    params = []
    for (out_f, in_f) in sizes:
        key, kw, kb = jax.random.split(key, 3)
        bound = 1.0 / jnp.sqrt(in_f)  # PyTorch default uniform bound
        w = jax.random.uniform(kw, (out_f, in_f), jnp.float32, -bound, bound)
        b = jax.random.uniform(kb, (out_f,), jnp.float32, -bound, bound)
        params.append((w, b))
    return params


def mlp_reference(x, params):
    """Pure-JAX reference for validation."""
    h = x
    for i, (w, b) in enumerate(params):
        h = h @ w.T + b
        if i < len(params) - 1:
            h = jnp.maximum(h, 0.0)
    return jax.nn.softmax(h, axis=1)


if __name__ == "__main__":
    # MLP(input_size=32, num_layer=2, layer_size=64, output_size=16, activation=nn.ReLU())
    input_size, num_layer, layer_size, output_size = 32, 2, 64, 16
    batch = 16

    key = jax.random.PRNGKey(0)
    kx, kp = jax.random.split(key)
    x = jax.random.normal(kx, (batch, input_size), dtype=jnp.float32)
    params = init_mlp_params(kp, input_size, num_layer, layer_size, output_size)
    ref = mlp_reference(x, params)

    # Default path: bf16 MXU operands, f32 accumulate / epilogue.
    forward = make_mlp_forward(params)
    out = jax.block_until_ready(forward(x))
    assert out.shape == (batch, output_size)
    assert jnp.allclose(jnp.sum(out, axis=1), 1.0, atol=1e-3), "softmax rows must sum to 1"
    assert jnp.allclose(out, ref, atol=3e-2, rtol=3e-2), "mismatch vs reference (bf16 MXU)"

    # Full-precision MXU path: tight check against the f32 reference.
    forward_f32 = make_mlp_forward(params, mxu_dtype=jnp.float32)
    out32 = jax.block_until_ready(forward_f32(x))
    assert jnp.allclose(jnp.sum(out32, axis=1), 1.0, atol=1e-3), "softmax rows must sum to 1"
    assert jnp.allclose(out32, ref, atol=1e-3, rtol=1e-3), "mismatch vs reference (f32 MXU)"

    print("KERNEL_OK")
</pallas_src>

<mosaic_0001>
module attributes {stable_mosaic.version = 11 : i64} {
  func.func @_mlp_kernel(%arg0: i32, %arg1: memref<8x128xf32, #tpu.memory_space<vmem>>, %arg2: memref<128x128xbf16, #tpu.memory_space<vmem>>, %arg3: memref<8x128xf32, #tpu.memory_space<vmem>>, %arg4: memref<128x128xbf16, #tpu.memory_space<vmem>>, %arg5: memref<8x128xf32, #tpu.memory_space<vmem>>, %arg6: memref<128x128xbf16, #tpu.memory_space<vmem>>, %arg7: memref<8x128xf32, #tpu.memory_space<vmem>>, %arg8: memref<8x128xf32, #tpu.memory_space<vmem>>) attributes {dimension_semantics = [#tpu.dimension_semantics<parallel>], iteration_bounds = array<i64: 2>, scalar_prefetch = 0 : i64, scratch_operands = 0 : i64, tpu.core_type = #tpu.core_type<tc>, window_params = [{transform_indices = @transform_0, window_bounds = array<i64: 8, 128>}, {pipeline_mode = #tpu.pipeline_mode<synchronous>, transform_indices = @transform_1, window_bounds = array<i64: 128, 128>}, {pipeline_mode = #tpu.pipeline_mode<synchronous>, transform_indices = @transform_2, window_bounds = array<i64: 8, 128>}, {pipeline_mode = #tpu.pipeline_mode<synchronous>, transform_indices = @transform_3, window_bounds = array<i64: 128, 128>}, {pipeline_mode = #tpu.pipeline_mode<synchronous>, transform_indices = @transform_4, window_bounds = array<i64: 8, 128>}, {pipeline_mode = #tpu.pipeline_mode<synchronous>, transform_indices = @transform_5, window_bounds = array<i64: 128, 128>}, {pipeline_mode = #tpu.pipeline_mode<synchronous>, transform_indices = @transform_6, window_bounds = array<i64: 8, 128>}, {transform_indices = @transform_7, window_bounds = array<i64: 8, 128>}]} {
    %c0 = arith.constant 0 : index
    %c0_0 = arith.constant 0 : index
    %0 = vector.load %arg1[%c0, %c0_0] : memref<8x128xf32, #tpu.memory_space<vmem>>, vector<8x128xf32>
    %c0_1 = arith.constant 0 : index
    %c0_2 = arith.constant 0 : index
    %1 = vector.load %arg2[%c0_1, %c0_2] : memref<128x128xbf16, #tpu.memory_space<vmem>>, vector<128x128xbf16>
    %c0_3 = arith.constant 0 : index
    %c0_4 = arith.constant 0 : index
    %2 = vector.load %arg3[%c0_3, %c0_4] : memref<8x128xf32, #tpu.memory_space<vmem>>, vector<8x128xf32>
    %3 = vector.extract_strided_slice %2 {offsets = [0, 0], sizes = [1, 128], strides = [1, 1]} : vector<8x128xf32> to vector<1x128xf32>
    %4 = arith.truncf %0 : vector<8x128xf32> to vector<8x128xbf16>
    %cst = arith.constant dense<0.000000e+00> : vector<8x128xf32>
    %5 = tpu.matmul %4, %1, %cst {dimension_numbers = #tpu.dot_dimension_numbers<[1], [0], [0], [1], [0, 0, 1, 1], [], []>} : vector<8x128xbf16>, vector<128x128xbf16>, vector<8x128xf32> -> vector<8x128xf32>
    %6 = vector.broadcast %3 : vector<1x128xf32> to vector<8x128xf32>
    %7 = arith.addf %5, %6 : vector<8x128xf32>
    %cst_5 = arith.constant 0.000000e+00 : f32
    %8 = vector.broadcast %cst_5 : f32 to vector<8x128xf32>
    %9 = arith.maximumf %7, %8 : vector<8x128xf32>
    %c0_6 = arith.constant 0 : index
    %c0_7 = arith.constant 0 : index
    %10 = vector.load %arg4[%c0_6, %c0_7] : memref<128x128xbf16, #tpu.memory_space<vmem>>, vector<128x128xbf16>
    %c0_8 = arith.constant 0 : index
    %c0_9 = arith.constant 0 : index
    %11 = vector.load %arg5[%c0_8, %c0_9] : memref<8x128xf32, #tpu.memory_space<vmem>>, vector<8x128xf32>
    %12 = vector.extract_strided_slice %11 {offsets = [0, 0], sizes = [1, 128], strides = [1, 1]} : vector<8x128xf32> to vector<1x128xf32>
    %13 = arith.truncf %9 : vector<8x128xf32> to vector<8x128xbf16>
    %cst_10 = arith.constant dense<0.000000e+00> : vector<8x128xf32>
    %14 = tpu.matmul %13, %10, %cst_10 {dimension_numbers = #tpu.dot_dimension_numbers<[1], [0], [0], [1], [0, 0, 1, 1], [], []>} : vector<8x128xbf16>, vector<128x128xbf16>, vector<8x128xf32> -> vector<8x128xf32>
    %15 = vector.broadcast %12 : vector<1x128xf32> to vector<8x128xf32>
    %16 = arith.addf %14, %15 : vector<8x128xf32>
    %cst_11 = arith.constant 0.000000e+00 : f32
    %17 = vector.broadcast %cst_11 : f32 to vector<8x128xf32>
    %18 = arith.maximumf %16, %17 : vector<8x128xf32>
    %c0_12 = arith.constant 0 : index
    %c0_13 = arith.constant 0 : index
    %19 = vector.load %arg6[%c0_12, %c0_13] : memref<128x128xbf16, #tpu.memory_space<vmem>>, vector<128x128xbf16>
    %c0_14 = arith.constant 0 : index
    %c0_15 = arith.constant 0 : index
    %20 = vector.load %arg7[%c0_14, %c0_15] : memref<8x128xf32, #tpu.memory_space<vmem>>, vector<8x128xf32>
    %21 = vector.extract_strided_slice %20 {offsets = [0, 0], sizes = [1, 128], strides = [1, 1]} : vector<8x128xf32> to vector<1x128xf32>
    %22 = arith.truncf %18 : vector<8x128xf32> to vector<8x128xbf16>
    %cst_16 = arith.constant dense<0.000000e+00> : vector<8x128xf32>
    %23 = tpu.matmul %22, %19, %cst_16 {dimension_numbers = #tpu.dot_dimension_numbers<[1], [0], [0], [1], [0, 0, 1, 1], [], []>} : vector<8x128xbf16>, vector<128x128xbf16>, vector<8x128xf32> -> vector<8x128xf32>
    %24 = vector.broadcast %21 : vector<1x128xf32> to vector<8x128xf32>
    %25 = arith.addf %23, %24 : vector<8x128xf32>
    %cst_17 = arith.constant dense<0xFF800000> : vector<8xf32>
    %26 = vector.multi_reduction <maximumf>, %25, %cst_17 [1] : vector<8x128xf32> to vector<8xf32>
    %27 = vector.shape_cast %26 : vector<8xf32> to vector<8x1xf32>
    %28 = vector.broadcast %27 : vector<8x1xf32> to vector<8x128xf32>
    %29 = arith.subf %25, %28 : vector<8x128xf32>
    %30 = math.exp %29 : vector<8x128xf32>
    %cst_18 = arith.constant dense<0.000000e+00> : vector<8xf32>
    %31 = vector.multi_reduction <add>, %30, %cst_18 [1] : vector<8x128xf32> to vector<8xf32>
    %32 = vector.shape_cast %31 : vector<8xf32> to vector<8x1xf32>
    %33 = vector.broadcast %32 : vector<8x1xf32> to vector<8x128xf32>
    %34 = arith.divf %30, %33 : vector<8x128xf32>
    %c0_19 = arith.constant 0 : index
    %c0_20 = arith.constant 0 : index
    %35 = vector.load %arg8[%c0_19, %c0_20] : memref<8x128xf32, #tpu.memory_space<vmem>>, vector<8x128xf32>
    tpu.vector_store %arg8[%c0_19, %c0_20], %34 {strides = array<i32>} : memref<8x128xf32, #tpu.memory_space<vmem>>, vector<8x128xf32>,
    return
  }
  func.func @transform_0(%arg0: i32) -> (i32, i32) {
    %c0_i32 = arith.constant 0 : i32
    %c0_i32_0 = arith.constant 0 : i32
    return %arg0, %c0_i32 : i32, i32
  }
  func.func @transform_1(%arg0: i32) -> (i32, i32) {
    %c0_i32 = arith.constant 0 : i32
    %c0_i32_0 = arith.constant 0 : i32
    %c0_i32_1 = arith.constant 0 : i32
    return %c0_i32, %c0_i32_0 : i32, i32
  }
  func.func @transform_2(%arg0: i32) -> (i32, i32) {
    %c0_i32 = arith.constant 0 : i32
    %c0_i32_0 = arith.constant 0 : i32
    %c0_i32_1 = arith.constant 0 : i32
    return %c0_i32, %c0_i32_0 : i32, i32
  }
  func.func @transform_3(%arg0: i32) -> (i32, i32) {
    %c0_i32 = arith.constant 0 : i32
    %c0_i32_0 = arith.constant 0 : i32
    %c0_i32_1 = arith.constant 0 : i32
    return %c0_i32, %c0_i32_0 : i32, i32
  }
  func.func @transform_4(%arg0: i32) -> (i32, i32) {
    %c0_i32 = arith.constant 0 : i32
    %c0_i32_0 = arith.constant 0 : i32
    %c0_i32_1 = arith.constant 0 : i32
    return %c0_i32, %c0_i32_0 : i32, i32
  }
  func.func @transform_5(%arg0: i32) -> (i32, i32) {
    %c0_i32 = arith.constant 0 : i32
    %c0_i32_0 = arith.constant 0 : i32
    %c0_i32_1 = arith.constant 0 : i32
    return %c0_i32, %c0_i32_0 : i32, i32
  }
  func.func @transform_6(%arg0: i32) -> (i32, i32) {
    %c0_i32 = arith.constant 0 : i32
    %c0_i32_0 = arith.constant 0 : i32
    %c0_i32_1 = arith.constant 0 : i32
    return %c0_i32, %c0_i32_0 : i32, i32
  }
  func.func @transform_7(%arg0: i32) -> (i32, i32) {
    %c0_i32 = arith.constant 0 : i32
    %c0_i32_0 = arith.constant 0 : i32
    return %arg0, %c0_i32 : i32, i32
  }
}

</mosaic_0001>

<llo_original>
// kernel: _forward.1
$region0: #{_forward.1}
  #allocation0 [shape = 'u32[]', space=smem, size = 0x4, offset = 0x4, fixed_abs, tag = 'smem constant byte address 0x4 - core index']
  #allocation1 [shape = 'u32[144,128]{1,0:T(1,128)}', space=vmem, size = 0x12000, scoped, tag = 'internal scratch']
  %s0 = inlined_call_operand.vmem [shape: f32[16,128], index: 0, kind: input, shape index: {}]
  %s1 = inlined_call_operand.vmem [shape: bf16[128,128], index: 1, kind: input, shape index: {}]
  %s2 = inlined_call_operand.vmem [shape: f32[8,128], index: 2, kind: input, shape index: {}]
  %s3 = inlined_call_operand.hbm [shape: bf16[128,128], index: 3, kind: input, shape index: {}]
  %s4 = inlined_call_operand.vmem [shape: f32[8,128], index: 4, kind: input, shape index: {}]
  %s5 = inlined_call_operand.hbm [shape: bf16[128,128], index: 5, kind: input, shape index: {}]
  %s6 = inlined_call_operand.vmem [shape: f32[8,128], index: 6, kind: input, shape index: {}]
  %s7 = inlined_call_operand.hbm [shape: f32[16,128], index: 7, kind: output, shape index: {}]
  %s8 = sld [smem:[#allocation0]]
  $region69: #{_forward.1} parent=0
    _
  %s10 = ssub.s32 1, %s8
  %s11 = scalar_select 0, %s10, %s8
  $region1: #{_forward.1} parent=0
    #allocation2 [shape = 'u8[32768]{0}', space=vmem, size = 0x8000, scoped, tag = 'input window, operand 3, single buffered']
    #allocation3 [shape = 's32[2]{0}', space=sflag, size = 0x8, scoped, tag = 'scoped memory for _forward.1']
    #allocation4 [shape = 's32[2]{0}', space=sflag, size = 0x8, scoped, tag = 'scoped memory for _forward.1']
    #allocation5 [shape = 'u8[32768]{0}', space=vmem, size = 0x8000, scoped, tag = 'input window, operand 5, single buffered']
    #allocation6 [shape = 's32[1]{0}', space=sflag, size = 0x4, scoped, tag = 'scoped memory for _forward.1']
    #allocation7 [shape = 'u8[8192]{0}', space=vmem, size = 0x2000, scoped, tag = 'output window, operand 0']
    %12 = vsyncpa [#allocation3], 0
    %13 = vsyncpa [#allocation6], 0
    %14 = vsyncpa [#allocation4], 0
    %s15 = scalar_lea.sflag [#allocation4], 1
    %16 = vsyncpa %s15, 0
    loop: start=0, step=1, limit=4
    $region2: #{_forward.1} parent=1 // loop_pre_header
      _
    $region3: #{_forward.1} parent=1 // loop_header
      %s18 = sphi 0, %s22
      %p19 = scmp.ge.s32.totalorder %s18, 4
      %s28 = sphi 0, %s30
      %s31 = sphi 0, %s28
      %s32 = sphi 0, %s31
      %s48 = sphi 0, %s32
      %s52 = sphi 0, %s52
      %s54 = sphi 0, %s52
      %s55 = sphi 0, %s54
      %s69 = sphi 0, %s55
      %s73 = sphi 0, %s73
      %s75 = sphi 0, %s73
      %s76 = sphi 0, %s75
      %s90 = sphi 0, %s76
      %s94 = sphi 0, %s94
      %s96 = sphi 0, %s94
      %s97 = sphi 0, %s96
      %s111 = sphi 0, %s97
      %s115 = sphi 0, %s115
      %s117 = sphi 0, %s115
      %s118 = sphi 0, %s117
      %s132 = sphi 0, %s118
      %s136 = sphi 0, %s136
      %s138 = sphi 0, %s136
      %s139 = sphi 0, %s138
      %s153 = sphi 0, %s139
      %s157 = sphi 0, %s157
      %s159 = sphi 0, %s157
      %s160 = sphi 0, %s159
      %s174 = sphi 0, %s160
      %s180 = sphi 0, %s182
      %s183 = sphi 0, %s180
      %s184 = sphi 0, %s183
      %s200 = sphi 0, %s184
    $region4: #{_forward.1} parent=1 // loop_header_branch
      %21 = sbr.rel (%p19) target = $region8
    $region5: #{_forward.1} parent=1 // loop_body
      %s23 = ssub.s32 %s18, 1
      %s24 = ssub.s32 %s18, 2
      %s25 = sadd.s32 %s18, 1
      %s26 = ssub.s32 %s18, %s25
      %p27 = scmp.eq.s32.totalorder %s26, 0
      %s29 = sadd.s32 %s28, 1
      %s30 = scalar_select %p27, %s28, %s29
      %p33 = pneg %p27
      %p34 = scmp.eq.s32.totalorder %s18, 1
      %p35 = por %p33, %p34
      %p36 = scmp.ne.s32.totalorder %s28, %s31
      %p37 = scmp.eq.s32.totalorder %s18, 0
      %p38 = por %p36, %p37
      %p39 = scmp.ne.s32.totalorder %s28, %s31
      %p40 = scmp.eq.s32.totalorder %s23, 1
      %p41 = por %p39, %p40
      %p42 = scmp.ne.s32.totalorder %s31, %s32
      %p43 = scmp.eq.s32.totalorder %s23, 0
      %p44 = por %p42, %p43
      %p45 = scmp.ne.s32.totalorder %s31, %s32
      %p46 = scmp.eq.s32.totalorder %s24, 1
      %p47 = por %p45, %p46
      %p49 = scmp.ne.s32.totalorder %s32, %s48
      %p50 = scmp.eq.s32.totalorder %s24, 0
      %p51 = por %p49, %p50
      %s53 = sadd.s32 %s52, 1
      %p56 = scmp.eq.s32.totalorder %s18, 1
      %p57 = scmp.ne.s32.totalorder %s52, %s54
      %p58 = scmp.eq.s32.totalorder %s18, 0
      %p59 = por %p57, %p58
      %p60 = scmp.ne.s32.totalorder %s52, %s54
      %p61 = scmp.eq.s32.totalorder %s23, 1
      %p62 = por %p60, %p61
      %p63 = scmp.ne.s32.totalorder %s54, %s55
      %p64 = scmp.eq.s32.totalorder %s23, 0
      %p65 = por %p63, %p64
      %p66 = scmp.ne.s32.totalorder %s54, %s55
      %p67 = scmp.eq.s32.totalorder %s24, 1
      %p68 = por %p66, %p67
      %p70 = scmp.ne.s32.totalorder %s55, %s69
      %p71 = scmp.eq.s32.totalorder %s24, 0
      %p72 = por %p70, %p71
      %s74 = sadd.s32 %s73, 1
      %p77 = scmp.eq.s32.totalorder %s18, 1
      %p78 = scmp.ne.s32.totalorder %s73, %s75
      %p79 = scmp.eq.s32.totalorder %s18, 0
      %p80 = por %p78, %p79
      %p81 = scmp.ne.s32.totalorder %s73, %s75
      %p82 = scmp.eq.s32.totalorder %s23, 1
      %p83 = por %p81, %p82
      %p84 = scmp.ne.s32.totalorder %s75, %s76
      %p85 = scmp.eq.s32.totalorder %s23, 0
      %p86 = por %p84, %p85
      %p87 = scmp.ne.s32.totalorder %s75, %s76
      %p88 = scmp.eq.s32.totalorder %s24, 1
      %p89 = por %p87, %p88
      %p91 = scmp.ne.s32.totalorder %s76, %s90
      %p92 = scmp.eq.s32.totalorder %s24, 0
      %p93 = por %p91, %p92
      %s95 = sadd.s32 %s94, 1
      %p98 = scmp.eq.s32.totalorder %s18, 1
      %p99 = scmp.ne.s32.totalorder %s94, %s96
      %p100 = scmp.eq.s32.totalorder %s18, 0
      %p101 = por %p99, %p100
      %p102 = scmp.ne.s32.totalorder %s94, %s96
      %p103 = scmp.eq.s32.totalorder %s23, 1
      %p104 = por %p102, %p103
      %p105 = scmp.ne.s32.totalorder %s96, %s97
      %p106 = scmp.eq.s32.totalorder %s23, 0
      %p107 = por %p105, %p106
      %p108 = scmp.ne.s32.totalorder %s96, %s97
      %p109 = scmp.eq.s32.totalorder %s24, 1
      %p110 = por %p108, %p109
      %p112 = scmp.ne.s32.totalorder %s97, %s111
      %p113 = scmp.eq.s32.totalorder %s24, 0
      %p114 = por %p112, %p113
      %s116 = sadd.s32 %s115, 1
      %p119 = scmp.eq.s32.totalorder %s18, 1
      %p120 = scmp.ne.s32.totalorder %s115, %s117
      %p121 = scmp.eq.s32.totalorder %s18, 0
      %p122 = por %p120, %p121
      %p123 = scmp.ne.s32.totalorder %s115, %s117
      %p124 = scmp.eq.s32.totalorder %s23, 1
      %p125 = por %p123, %p124
      %p126 = scmp.ne.s32.totalorder %s117, %s118
      %p127 = scmp.eq.s32.totalorder %s23, 0
      %p128 = por %p126, %p127
      %p129 = scmp.ne.s32.totalorder %s117, %s118
      %p130 = scmp.eq.s32.totalorder %s24, 1
      %p131 = por %p129, %p130
      %p133 = scmp.ne.s32.totalorder %s118, %s132
      %p134 = scmp.eq.s32.totalorder %s24, 0
      %p135 = por %p133, %p134
      %s137 = sadd.s32 %s136, 1
      %p140 = scmp.eq.s32.totalorder %s18, 1
      %p141 = scmp.ne.s32.totalorder %s136, %s138
      %p142 = scmp.eq.s32.totalorder %s18, 0
      %p143 = por %p141, %p142
      %p144 = scmp.ne.s32.totalorder %s136, %s138
      %p145 = scmp.eq.s32.totalorder %s23, 1
      %p146 = por %p144, %p145
      %p147 = scmp.ne.s32.totalorder %s138, %s139
      %p148 = scmp.eq.s32.totalorder %s23, 0
      %p149 = por %p147, %p148
      %p150 = scmp.ne.s32.totalorder %s138, %s139
      %p151 = scmp.eq.s32.totalorder %s24, 1
      %p152 = por %p150, %p151
      %p154 = scmp.ne.s32.totalorder %s139, %s153
      %p155 = scmp.eq.s32.totalorder %s24, 0
      %p156 = por %p154, %p155
      %s158 = sadd.s32 %s157, 1
      %p161 = scmp.eq.s32.totalorder %s18, 1
      %p162 = scmp.ne.s32.totalorder %s157, %s159
      %p163 = scmp.eq.s32.totalorder %s18, 0
      %p164 = por %p162, %p163
      %p165 = scmp.ne.s32.totalorder %s157, %s159
      %p166 = scmp.eq.s32.totalorder %s23, 1
      %p167 = por %p165, %p166
      %p168 = scmp.ne.s32.totalorder %s159, %s160
      %p169 = scmp.eq.s32.totalorder %s23, 0
      %p170 = por %p168, %p169
      %p171 = scmp.ne.s32.totalorder %s159, %s160
      %p172 = scmp.eq.s32.totalorder %s24, 1
      %p173 = por %p171, %p172
      %p175 = scmp.ne.s32.totalorder %s160, %s174
      %p176 = scmp.eq.s32.totalorder %s24, 0
      %p177 = por %p175, %p176
      %s178 = ssub.s32 %s18, %s25
      %p179 = scmp.eq.s32.totalorder %s178, 0
      %s181 = sadd.s32 %s180, 1
      %s182 = scalar_select %p179, %s180, %s181
      %p185 = pneg %p179
      %p186 = scmp.eq.s32.totalorder %s18, 1
      %p187 = por %p185, %p186
      %p188 = scmp.ne.s32.totalorder %s180, %s183
      %p189 = scmp.eq.s32.totalorder %s18, 0
      %p190 = por %p188, %p189
      %p191 = scmp.ne.s32.totalorder %s180, %s183
      %p192 = scmp.eq.s32.totalorder %s23, 1
      %p193 = por %p191, %p192
      %p194 = scmp.ne.s32.totalorder %s183, %s184
      %p195 = scmp.eq.s32.totalorder %s23, 0
      %p196 = por %p194, %p195
      %p197 = scmp.ne.s32.totalorder %s183, %s184
      %p198 = scmp.eq.s32.totalorder %s24, 1
      %p199 = por %p197, %p198
      %p201 = scmp.ne.s32.totalorder %s184, %s200
      %p202 = scmp.eq.s32.totalorder %s24, 0
      %p203 = por %p201, %p202
      %p204 = scmp.le.s32.totalorder 1, %s18
      %p205 = scmp.lt.s32.totalorder %s18, 3
      %p206 = pnand %p204, %p205
      %p207 = pneg %p206
      // Predicated region
      $region9: #{_forward.1} parent=5 // pred_check
        _
      $region10: #{_forward.1} parent=5 // pred_check_branch
        %209 = sbr.rel (%p206) target = $region12
      $region11: #{_forward.1} parent=5 // pred_region
        %s210 = ssub.s32 %s18, 1
        // Predicated region
        $region13: #{_forward.1} parent=11 // pred_check
          %p211 = pneg %p65
        $region14: #{_forward.1} parent=11 // pred_check_branch
          %213 = sbr.rel (%p211) target = $region16
        $region15: #{_forward.1} parent=11 // pred_region
          _
        $region16: #{_forward.1} parent=11 // pred_fallthru
          _
        // Predicated region
        $region17: #{_forward.1} parent=11 // pred_check
          %p214 = pneg %p86
        $region18: #{_forward.1} parent=11 // pred_check_branch
          %216 = sbr.rel (%p214) target = $region20
        $region19: #{_forward.1} parent=11 // pred_region
          _
        $region20: #{_forward.1} parent=11 // pred_fallthru
          _
        // Predicated region
        $region21: #{_forward.1} parent=11 // pred_check
          %p217 = pneg %p107
        $region22: #{_forward.1} parent=11 // pred_check_branch
          %219 = sbr.rel (%p217) target = $region24
        $region23: #{_forward.1} parent=11 // pred_region
          %s221 = ssub.s32 1024, 1024
          %222 = vsyncadd [#allocation3], %s221
          %s223 = sshll.u32 [#allocation2], 4
          %s224 = int_to_ptr.vmem [resolvable:$true] %s223
          %229 = dma.hbm_to_vmem [thread:$0]  %s3, 1024, %s224, [#allocation3], 64, 64, 4
        $region24: #{_forward.1} parent=11 // pred_fallthru
          _
        // Predicated region
        $region25: #{_forward.1} parent=11 // pred_check
          %p230 = pneg %p128
        $region26: #{_forward.1} parent=11 // pred_check_branch
          %232 = sbr.rel (%p230) target = $region28
        $region27: #{_forward.1} parent=11 // pred_region
          _
        $region28: #{_forward.1} parent=11 // pred_fallthru
          _
        // Predicated region
        $region29: #{_forward.1} parent=11 // pred_check
          %p233 = pneg %p149
        $region30: #{_forward.1} parent=11 // pred_check_branch
          %235 = sbr.rel (%p233) target = $region32
        $region31: #{_forward.1} parent=11 // pred_region
          %s237 = ssub.s32 1024, 1024
          %238 = vsyncadd [#allocation6], %s237
          %s239 = sshll.u32 [#allocation5], 4
          %s240 = int_to_ptr.vmem [resolvable:$true] %s239
          %245 = dma.hbm_to_vmem [thread:$0]  %s5, 1024, %s240, [#allocation6], 64, 64, 4
        $region32: #{_forward.1} parent=11 // pred_fallthru
          _
        // Predicated region
        $region33: #{_forward.1} parent=11 // pred_check
          %p246 = pneg %p170
        $region34: #{_forward.1} parent=11 // pred_check_branch
          %248 = sbr.rel (%p246) target = $region36
        $region35: #{_forward.1} parent=11 // pred_region
          _
        $region36: #{_forward.1} parent=11 // pred_fallthru
          _
      $region12: #{_forward.1} parent=5 // pred_fallthru
        _
      %p249 = scmp.lt.s32.totalorder %s18, 2
      // Predicated region
      $region37: #{_forward.1} parent=5 // pred_check
        %p250 = pneg %p249
      $region38: #{_forward.1} parent=5 // pred_check_branch
        %252 = sbr.rel (%p250) target = $region40
      $region39: #{_forward.1} parent=5 // pred_region
        // Predicated region
        $region41: #{_forward.1} parent=39 // pred_check
          %p253 = pneg %p38
        $region42: #{_forward.1} parent=39 // pred_check_branch
          %255 = sbr.rel (%p253) target = $region44
        $region43: #{_forward.1} parent=39 // pred_region
          %p256 = scmp.lt.s32.totalorder %s18, 1
          %s257 = scalar_select %p256, %s18, 1
          %s258 = smul.addr %s257, 8
          %s259 = scalar_lea.vmem %s0, %s258
        $region44: #{_forward.1} parent=39 // pred_fallthru
          _
      $region40: #{_forward.1} parent=5 // pred_fallthru
        _
      %p260 = scmp.le.s32.totalorder 1, %s18
      %p261 = scmp.lt.s32.totalorder %s18, 3
      %p262 = pnand %p260, %p261
      %p263 = pneg %p262
      // Predicated region
      $region45: #{_forward.1} parent=5 // pred_check
        _
      $region46: #{_forward.1} parent=5 // pred_check_branch
        %265 = sbr.rel (%p262) target = $region48
      $region47: #{_forward.1} parent=5 // pred_region
        %s266 = ssub.s32 %s18, 1
        // Predicated region
        $region49: #{_forward.1} parent=47 // pred_check
          %p267 = pneg %p107
        $region50: #{_forward.1} parent=47 // pred_check_branch
          %269 = sbr.rel (%p267) target = $region52
        $region51: #{_forward.1} parent=47 // pred_region
          %270 = dma.done [#allocation3], 1024
        $region52: #{_forward.1} parent=47 // pred_fallthru
          _
        // Predicated region
        $region53: #{_forward.1} parent=47 // pred_check
          %p271 = pneg %p149
        $region54: #{_forward.1} parent=47 // pred_check_branch
          %273 = sbr.rel (%p271) target = $region56
        $region55: #{_forward.1} parent=47 // pred_region
          %274 = dma.done [#allocation6], 1024
        $region56: #{_forward.1} parent=47 // pred_fallthru
          _
        %p275 = scmp.lt.s32.totalorder %s23, 1
        %s276 = scalar_select %p275, %s23, 1
        %s277 = smul.addr %s276, 8
        %s278 = scalar_lea.vmem %s0, %s277
        %p279 = pneg %p44
        %p280 = pneg %p41
        %p281 = pneg %p65
        %p282 = pneg %p62
        %p283 = pneg %p86
        %p284 = pneg %p83
        %p285 = pneg %p107
        %p286 = pneg %p104
        %p287 = pneg %p128
        %p288 = pneg %p125
        %p289 = pneg %p149
        %p290 = pneg %p146
        %p291 = pneg %p170
        %p292 = pneg %p167
        %p293 = pneg %p196
        %p294 = pneg %p193
        %s295 = sand.u32 %s183, 1
        %s296 = scalar_lea.sflag [#allocation4], %s295
        %s297 = sand.u32 %s183, 1
        %s298 = smul.addr %s297, 8
        %s299 = scalar_lea.vmem [#allocation7], %s298
        %p300 = scmp.lt.s32.totalorder %s23, 1
        %s301 = scalar_select %p300, %s23, 1
        %s302 = smul.addr %s301, 8
        %s303 = scalar_lea.vmem %s0, %s302
        %v305 = vld [vmem:[%s303] sm:$0xff]
        %v306 = vld [vmem:[%s1] sm:$0xf]
        %v307 = vld [vmem:[%s1 + $0x4] sm:$0xf]
        %v308 = vld [vmem:[%s1 + $0x8] sm:$0xf]
        %v309 = vld [vmem:[%s1 + $0xc] sm:$0xf]
        %v310 = vld [vmem:[%s1 + $0x10] sm:$0xf]
        %v311 = vld [vmem:[%s1 + $0x14] sm:$0xf]
        %v312 = vld [vmem:[%s1 + $0x18] sm:$0xf]
        %v313 = vld [vmem:[%s1 + $0x1c] sm:$0xf]
        %v314 = vld [vmem:[%s1 + $0x20] sm:$0xf]
        %v315 = vld [vmem:[%s1 + $0x24] sm:$0xf]
        %v316 = vld [vmem:[%s1 + $0x28] sm:$0xf]
        %v317 = vld [vmem:[%s1 + $0x2c] sm:$0xf]
        %v318 = vld [vmem:[%s1 + $0x30] sm:$0xf]
        %v319 = vld [vmem:[%s1 + $0x34] sm:$0xf]
        %v320 = vld [vmem:[%s1 + $0x38] sm:$0xf]
        %v321 = vld [vmem:[%s1 + $0x3c] sm:$0xf]
        %v322 = vld [vmem:[%s2] sm:$0xff]
        %v323 = vpack.c.bf16 %v305, %v305
        %v324 = vlaneseq
        %v325 = vshrl.u32 %v324, 7
        %v326 = vsub.s32 0, %v325
        %v327 = vrot.slane %v322, %v326
        %v344 = vunpack.c.l.b16 %v306
        %v345 = vunpack.c.l.b16 %v307
        %v346 = vunpack.c.l.b16 %v308
        %v347 = vunpack.c.l.b16 %v309
        %v348 = vunpack.c.l.b16 %v310
        %v349 = vunpack.c.l.b16 %v311
        %v350 = vunpack.c.l.b16 %v312
        %v351 = vunpack.c.l.b16 %v313
        %v352 = vunpack.c.l.b16 %v314
        %v353 = vunpack.c.l.b16 %v315
        %v354 = vunpack.c.l.b16 %v316
        %v355 = vunpack.c.l.b16 %v317
        %v356 = vunpack.c.l.b16 %v318
        %v357 = vunpack.c.l.b16 %v319
        %v358 = vunpack.c.l.b16 %v320
        %v359 = vunpack.c.l.b16 %v321
        %v360 = vpack.c.b16 %v345, %v344
        %v361 = vpack.c.b16 %v347, %v346
        %v362 = vpack.c.b16 %v349, %v348
        %v363 = vpack.c.b16 %v351, %v350
        %v364 = vpack.c.b16 %v353, %v352
        %v365 = vpack.c.b16 %v355, %v354
        %v366 = vpack.c.b16 %v357, %v356
        %v367 = vpack.c.b16 %v359, %v358
        %376 = vmatprep.subr.bf16.mxu0 0
        %377 = vmatpush1.bf16.msra.mxu0 %v360
        %378 = vmatprep.subr.bf16.mxu0 0
        %379 = vmatpush1.bf16.msra.mxu0 %v361
        %380 = vmatprep.subr.bf16.mxu0 0
        %381 = vmatpush1.bf16.msra.mxu0 %v362
        %382 = vmatprep.subr.bf16.mxu0 0
        %383 = vmatpush1.bf16.msra.mxu0 %v363
        %384 = vmatprep.subr.bf16.mxu0 0
        %385 = vmatpush1.bf16.msra.mxu0 %v364
        %386 = vmatprep.subr.bf16.mxu0 0
        %387 = vmatpush1.bf16.msra.mxu0 %v365
        %388 = vmatprep.subr.bf16.mxu0 0
        %389 = vmatpush1.bf16.msra.mxu0 %v366
        %390 = vmatprep.subr.bf16.mxu0 0
        %391 = vmatpush1.bf16.msra.mxu0 %v367
        %392 = vmatprep.subr.bf16.mxu0 0
        %393 = vmatpush1.bf16.msra.mxu0 0
        %394 = vmatprep.subr.bf16.mxu0 0
        %395 = vmatpush1.bf16.msra.mxu0 0
        %396 = vmatprep.subr.bf16.mxu0 0
        %397 = vmatpush1.bf16.msra.mxu0 0
        %398 = vmatprep.subr.bf16.mxu0 0
        %399 = vmatpush1.bf16.msra.mxu0 0
        %400 = vmatprep.subr.bf16.mxu0 0
        %401 = vmatpush1.bf16.msra.mxu0 0
        %402 = vmatprep.subr.bf16.mxu0 0
        %403 = vmatpush1.bf16.msra.mxu0 0
        %404 = vmatprep.subr.bf16.mxu0 0
        %405 = vmatpush1.bf16.msra.mxu0 0
        %406 = vmatprep.subr.bf16.mxu0 0
        %407 = vmatpush1.bf16.msra.mxu0 0
        %408 = vmatprep.mubr.bf16.mxu0 0
        %409 = vmatmul.mubr.bf16.gmra.mrb[0].mxu0 %v323
        %v410 = vpop.f32.mrb[0].mxu0
        %v411 = vadd.f32 %v327, %v410
        %v412 = vpop.f32.mrb[0].mxu0
        %v413 = vpop.f32.mrb[0].mxu0
        %v414 = vpop.f32.mrb[0].mxu0
        %415 = vdwg.mxu0
        %v416 = vmax.f32 %v411, 0.0
        %v417 = vld [vmem:[#allocation2] sm:$0xf]
        %v418 = vld [vmem:[#allocation2 + $0x4] sm:$0xf]
        %v419 = vld [vmem:[#allocation2 + $0x8] sm:$0xf]
        %v420 = vld [vmem:[#allocation2 + $0xc] sm:$0xf]
        %v421 = vld [vmem:[#allocation2 + $0x10] sm:$0xf]
        %v422 = vld [vmem:[#allocation2 + $0x14] sm:$0xf]
        %v423 = vld [vmem:[#allocation2 + $0x18] sm:$0xf]
        %v424 = vld [vmem:[#allocation2 + $0x1c] sm:$0xf]
        %v425 = vld [vmem:[#allocation2 + $0x20] sm:$0xf]
        %v426 = vld [vmem:[#allocation2 + $0x24] sm:$0xf]
        %v427 = vld [vmem:[#allocation2 + $0x28] sm:$0xf]
        %v428 = vld [vmem:[#allocation2 + $0x2c] sm:$0xf]
        %v429 = vld [vmem:[#allocation2 + $0x30] sm:$0xf]
        %v430 = vld [vmem:[#allocation2 + $0x34] sm:$0xf]
        %v431 = vld [vmem:[#allocation2 + $0x38] sm:$0xf]
        %v432 = vld [vmem:[#allocation2 + $0x3c] sm:$0xf]
        %v433 = vld [vmem:[%s4] sm:$0xff]
        %v434 = vpack.c.bf16 %v416, %v416
        %v435 = vlaneseq
        %v436 = vshrl.u32 %v435, 7
        %v437 = vsub.s32 0, %v436
        %v438 = vrot.slane %v433, %v437
        %v455 = vunpack.c.l.b16 %v417
        %v456 = vunpack.c.l.b16 %v418
        %v457 = vunpack.c.l.b16 %v419
        %v458 = vunpack.c.l.b16 %v420
        %v459 = vunpack.c.l.b16 %v421
        %v460 = vunpack.c.l.b16 %v422
        %v461 = vunpack.c.l.b16 %v423
        %v462 = vunpack.c.l.b16 %v424
        %v463 = vunpack.c.l.b16 %v425
        %v464 = vunpack.c.l.b16 %v426
        %v465 = vunpack.c.l.b16 %v427
        %v466 = vunpack.c.l.b16 %v428
        %v467 = vunpack.c.l.b16 %v429
        %v468 = vunpack.c.l.b16 %v430
        %v469 = vunpack.c.l.b16 %v431
        %v470 = vunpack.c.l.b16 %v432
        %v471 = vpack.c.b16 %v456, %v455
        %v472 = vpack.c.b16 %v458, %v457
        %v473 = vpack.c.b16 %v460, %v459
        %v474 = vpack.c.b16 %v462, %v461
        %v475 = vpack.c.b16 %v464, %v463
        %v476 = vpack.c.b16 %v466, %v465
        %v477 = vpack.c.b16 %v468, %v467
        %v478 = vpack.c.b16 %v470, %v469
        %487 = vmatprep.subr.bf16.mxu0 0
        %488 = vmatpush1.bf16.msra.mxu0 %v471
        %489 = vmatprep.subr.bf16.mxu0 0
        %490 = vmatpush1.bf16.msra.mxu0 %v472
        %491 = vmatprep.subr.bf16.mxu0 0
        %492 = vmatpush1.bf16.msra.mxu0 %v473
        %493 = vmatprep.subr.bf16.mxu0 0
        %494 = vmatpush1.bf16.msra.mxu0 %v474
        %495 = vmatprep.subr.bf16.mxu0 0
        %496 = vmatpush1.bf16.msra.mxu0 %v475
        %497 = vmatprep.subr.bf16.mxu0 0
        %498 = vmatpush1.bf16.msra.mxu0 %v476
        %499 = vmatprep.subr.bf16.mxu0 0
        %500 = vmatpush1.bf16.msra.mxu0 %v477
        %501 = vmatprep.subr.bf16.mxu0 0
        %502 = vmatpush1.bf16.msra.mxu0 %v478
        %503 = vmatprep.subr.bf16.mxu0 0
        %504 = vmatpush1.bf16.msra.mxu0 0
        %505 = vmatprep.subr.bf16.mxu0 0
        %506 = vmatpush1.bf16.msra.mxu0 0
        %507 = vmatprep.subr.bf16.mxu0 0
        %508 = vmatpush1.bf16.msra.mxu0 0
        %509 = vmatprep.subr.bf16.mxu0 0
        %510 = vmatpush1.bf16.msra.mxu0 0
        %511 = vmatprep.subr.bf16.mxu0 0
        %512 = vmatpush1.bf16.msra.mxu0 0
        %513 = vmatprep.subr.bf16.mxu0 0
        %514 = vmatpush1.bf16.msra.mxu0 0
        %515 = vmatprep.subr.bf16.mxu0 0
        %516 = vmatpush1.bf16.msra.mxu0 0
        %517 = vmatprep.subr.bf16.mxu0 0
        %518 = vmatpush1.bf16.msra.mxu0 0
        %519 = vmatprep.mubr.bf16.mxu0 0
        %520 = vmatmul.mubr.bf16.gmra.mrb[0].mxu0 %v434
        %v521 = vpop.f32.mrb[0].mxu0
        %v522 = vadd.f32 %v438, %v521
        %v523 = vpop.f32.mrb[0].mxu0
        %v524 = vpop.f32.mrb[0].mxu0
        %v525 = vpop.f32.mrb[0].mxu0
        %526 = vdwg.mxu0
        %v527 = vmax.f32 %v522, 0.0
        %v528 = vld [vmem:[#allocation5] sm:$0xf]
        %v529 = vld [vmem:[#allocation5 + $0x4] sm:$0xf]
        %v530 = vld [vmem:[#allocation5 + $0x8] sm:$0xf]
        %v531 = vld [vmem:[#allocation5 + $0xc] sm:$0xf]
        %v532 = vld [vmem:[#allocation5 + $0x10] sm:$0xf]
        %v533 = vld [vmem:[#allocation5 + $0x14] sm:$0xf]
        %v534 = vld [vmem:[#allocation5 + $0x18] sm:$0xf]
        %v535 = vld [vmem:[#allocation5 + $0x1c] sm:$0xf]
        %v536 = vld [vmem:[#allocation5 + $0x20] sm:$0xf]
        %v537 = vld [vmem:[#allocation5 + $0x24] sm:$0xf]
        %v538 = vld [vmem:[#allocation5 + $0x28] sm:$0xf]
        %v539 = vld [vmem:[#allocation5 + $0x2c] sm:$0xf]
        %v540 = vld [vmem:[#allocation5 + $0x30] sm:$0xf]
        %v541 = vld [vmem:[#allocation5 + $0x34] sm:$0xf]
        %v542 = vld [vmem:[#allocation5 + $0x38] sm:$0xf]
        %v543 = vld [vmem:[#allocation5 + $0x3c] sm:$0xf]
        %v544 = vld [vmem:[%s6] sm:$0xff]
        %v545 = vpack.c.bf16 %v527, %v527
        %v546 = vlaneseq
        %v547 = vshrl.u32 %v546, 7
        %v548 = vsub.s32 0, %v547
        %v549 = vrot.slane %v544, %v548
        %v566 = vunpack.c.l.b16 %v528
        %v567 = vunpack.c.l.b16 %v529
        %v568 = vunpack.c.l.b16 %v530
        %v569 = vunpack.c.l.b16 %v531
        %v570 = vunpack.c.l.b16 %v532
        %v571 = vunpack.c.l.b16 %v533
        %v572 = vunpack.c.l.b16 %v534
        %v573 = vunpack.c.l.b16 %v535
        %v574 = vunpack.c.l.b16 %v536
        %v575 = vunpack.c.l.b16 %v537
        %v576 = vunpack.c.l.b16 %v538
        %v577 = vunpack.c.l.b16 %v539
        %v578 = vunpack.c.l.b16 %v540
        %v579 = vunpack.c.l.b16 %v541
        %v580 = vunpack.c.l.b16 %v542
        %v581 = vunpack.c.l.b16 %v543
        %v582 = vpack.c.b16 %v567, %v566
        %v583 = vpack.c.b16 %v569, %v568
        %v584 = vpack.c.b16 %v571, %v570
        %v585 = vpack.c.b16 %v573, %v572
        %v586 = vpack.c.b16 %v575, %v574
        %v587 = vpack.c.b16 %v577, %v576
        %v588 = vpack.c.b16 %v579, %v578
        %v589 = vpack.c.b16 %v581, %v580
        %598 = vmatprep.subr.bf16.mxu0 0
        %599 = vmatpush1.bf16.msra.mxu0 %v582
        %600 = vmatprep.subr.bf16.mxu0 0
        %601 = vmatpush1.bf16.msra.mxu0 %v583
        %602 = vmatprep.subr.bf16.mxu0 0
        %603 = vmatpush1.bf16.msra.mxu0 %v584
        %604 = vmatprep.subr.bf16.mxu0 0
        %605 = vmatpush1.bf16.msra.mxu0 %v585
        %606 = vmatprep.subr.bf16.mxu0 0
        %607 = vmatpush1.bf16.msra.mxu0 %v586
        %608 = vmatprep.subr.bf16.mxu0 0
        %609 = vmatpush1.bf16.msra.mxu0 %v587
        %610 = vmatprep.subr.bf16.mxu0 0
        %611 = vmatpush1.bf16.msra.mxu0 %v588
        %612 = vmatprep.subr.bf16.mxu0 0
        %613 = vmatpush1.bf16.msra.mxu0 %v589
        %614 = vmatprep.subr.bf16.mxu0 0
        %615 = vmatpush1.bf16.msra.mxu0 0
        %616 = vmatprep.subr.bf16.mxu0 0
        %617 = vmatpush1.bf16.msra.mxu0 0
        %618 = vmatprep.subr.bf16.mxu0 0
        %619 = vmatpush1.bf16.msra.mxu0 0
        %620 = vmatprep.subr.bf16.mxu0 0
        %621 = vmatpush1.bf16.msra.mxu0 0
        %622 = vmatprep.subr.bf16.mxu0 0
        %623 = vmatpush1.bf16.msra.mxu0 0
        %624 = vmatprep.subr.bf16.mxu0 0
        %625 = vmatpush1.bf16.msra.mxu0 0
        %626 = vmatprep.subr.bf16.mxu0 0
        %627 = vmatpush1.bf16.msra.mxu0 0
        %628 = vmatprep.subr.bf16.mxu0 0
        %629 = vmatpush1.bf16.msra.mxu0 0
        %630 = vmatprep.mubr.bf16.mxu0 0
        %631 = vmatmul.mubr.bf16.gmra.mrb[0].mxu0 %v545
        %v632 = vpop.f32.mrb[0].mxu0
        %v633 = vadd.f32 %v549, %v632
        %v634 = vpop.f32.mrb[0].mxu0
        %v635 = vpop.f32.mrb[0].mxu0
        %v636 = vpop.f32.mrb[0].mxu0
        %637 = vdwg.mxu0
        %638 = vmax.xlane.f32.xlu0 %v633
        %v639 = vpop.xlane.xlu0 %638
        %v640 = vsub.f32 %v633, %v639
        %v641 = vmul.f32 %v640, 1.442695
        %v642 = vpow.pop %v641
        %643 = vadd.xlane.f32.xlu0 %v642
        %v644 = vpop.xlane.xlu0 %643
        %v645 = vrcp.pop %v644
        %v646 = vmul.f32 %v642, %v645
        %647 = vst [vmem:[%s299] sm:$0xff] %v646
        %s648 = sand.u32 %s183, 1
        %s649 = scalar_lea.sflag [#allocation4], %s648
        %s650 = sand.u32 %s183, 1
        %s651 = smul.addr %s650, 8
        %s652 = scalar_lea.vmem [#allocation7], %s651
        // Predicated region
        $region57: #{_forward.1} parent=47 // pred_check
          %p653 = pneg %p193
        $region58: #{_forward.1} parent=47 // pred_check_branch
          %655 = sbr.rel (%p653) target = $region60
        $region59: #{_forward.1} parent=47 // pred_region
          %s657 = ssub.s32 128, 128
          %658 = vsyncadd %s649, %s657
          %s659 = smul.addr %s23, 128
          %s660 = scalar_lea.hbm %s7, %s659
          %s662 = sshll.u32 %s652, 4
          %s663 = int_to_ptr.vmem [resolvable:$true] %s662
          %665 = dma.vmem_to_hbm [thread:$0]  %s663, 128, %s660, %s649
        $region60: #{_forward.1} parent=47 // pred_fallthru
          _
      $region48: #{_forward.1} parent=5 // pred_fallthru
        _
      %p666 = scmp.le.s32.totalorder 2, %s18
      // Predicated region
      $region61: #{_forward.1} parent=5 // pred_check
        %p667 = pneg %p666
      $region62: #{_forward.1} parent=5 // pred_check_branch
        %669 = sbr.rel (%p667) target = $region64
      $region63: #{_forward.1} parent=5 // pred_region
        %s670 = ssub.s32 %s18, 2
        // Predicated region
        $region65: #{_forward.1} parent=63 // pred_check
          %p671 = pneg %p199
        $region66: #{_forward.1} parent=63 // pred_check_branch
          %673 = sbr.rel (%p671) target = $region68
        $region67: #{_forward.1} parent=63 // pred_region
          %s674 = sand.u32 %s184, 1
          %s675 = scalar_lea.sflag [#allocation4], %s674
          %s676 = sand.u32 %s184, 1
          %s677 = smul.addr %s676, 8
          %s678 = scalar_lea.vmem [#allocation7], %s677
          %679 = dma.done %s675, 128
        $region68: #{_forward.1} parent=63 // pred_fallthru
          _
      $region64: #{_forward.1} parent=5 // pred_fallthru
        _
    $region6: #{_forward.1} parent=1 // loop_footer
      %s22 = sadd.s32 1, %s18
    $region7: #{_forward.1} parent=1 // loop_footer_branch
      %17 = sbr.rel target = $region3
    $region8: #{_forward.1} parent=1 // loop_exit
      _
    %680 = vsyncpa [#allocation3], 1
    %s681 = scalar_lea.sflag [#allocation3], 1
    %682 = vsyncpa %s681, 1
    %683 = vsyncpa [#allocation6], 1
    %684 = vsyncpa [#allocation4], 1
    %s685 = scalar_lea.sflag [#allocation4], 1
    %686 = vsyncpa %s685, 1

</llo_original>
